<compile_context>
chip_gen: v6e
topology: v6e:2x2x1
jax: 0.10.0
libtpu: 0.0.40
codegen_flags: <defaults>
</compile_context>

<pallas_src>
import jax
import jax.numpy as jnp
from jax.experimental import pallas as pl
from jax.experimental.pallas import tpu as pltpu

IN_DIM, H1, H2, OUT_DIM = 16, 64, 32, 6
OUT_PAD = 8  # padded logits width (real logits live in [:, :6]); 8 = full last dim


def policy_mlp_kernel(x_ref, w1_ref, b1_ref, w2_ref, b2_ref, w3_ref, b3_ref, o_ref):
    # x tile: (TB, 16). Weights/biases use constant index_maps, so they are
    # fetched once and stay VMEM-resident across the whole grid; only x and
    # the (TB, 8) output stream HBM<->VMEM per grid step.
    x = x_ref[...]

    # fc1 + ReLU  (MXU matmul, f32 accumulation; all elementwise stays f32)
    h1 = jnp.dot(x, w1_ref[...], preferred_element_type=jnp.float32) + b1_ref[...]
    h1 = jnp.maximum(h1, 0.0)

    # fc2 + ReLU  (cast only at the matmul operand)
    h2 = jnp.dot(h1.astype(w2_ref.dtype), w2_ref[...],
                 preferred_element_type=jnp.float32) + b2_ref[...]
    h2 = jnp.maximum(h2, 0.0)

    # fc3 (logits, no activation). Output padded only to 8 lanes.
    out = jnp.dot(h2.astype(w3_ref.dtype), w3_ref[...],
                  preferred_element_type=jnp.float32) + b3_ref[...]
    o_ref[...] = out.astype(o_ref.dtype)


def _round_up(n, m):
    return ((n + m - 1) // m) * m


def pack_params(params, compute_dtype=jnp.bfloat16):
    """Pad fc3 to OUT_PAD output columns and cast weights to the matmul-operand
    dtype. Biases stay f32 (all elementwise work is f32)."""
    w3 = jnp.zeros((H2, OUT_PAD), jnp.float32).at[:, :OUT_DIM].set(params["w3"])
    b3 = jnp.zeros((1, OUT_PAD), jnp.float32).at[:, :OUT_DIM].set(params["b3"])
    return {
        "w1": params["w1"].astype(compute_dtype),
        "b1": params["b1"].astype(jnp.float32),
        "w2": params["w2"].astype(compute_dtype),
        "b2": params["b2"].astype(jnp.float32),
        "w3": w3.astype(compute_dtype),
        "b3": b3,
    }


def _fused_jnp_forward(x, params):
    """Small-batch path: let XLA fuse the 3-layer MLP (f32, exact)."""
    h1 = jnp.maximum(x @ params["w1"] + params["b1"], 0.0)
    h2 = jnp.maximum(h1 @ params["w2"] + params["b2"], 0.0)
    return h2 @ params["w3"] + params["b3"]


def _pick_tile(B, block_b):
    """Batch tile: as large as possible, but keep >= 2 grid steps when the
    batch is big enough so v7x's two TensorCores both get work."""
    B8 = _round_up(B, 8)
    if B8 < 512:
        return B8                      # tiny batch: single tile, overhead-bound anyway
    if B8 <= block_b:
        return _round_up((B8 + 1) // 2, 8)  # split into 2 tiles for megacore
    return block_b                      # big batch: grid already has >= 2 steps


def policy_forward(x, params, *, block_b=2048, compute_dtype=jnp.bfloat16,
                   out_dtype=jnp.float32, use_pallas=None,
                   small_batch_threshold=256):
    """Policy forward: x (B, 16) f32 -> logits (B, 6) f32 (or out_dtype)."""
    B = x.shape[0]
    if use_pallas is None:
        use_pallas = B >= small_batch_threshold
    if not use_pallas:
        # 1-step Pallas grid + 7 weight DMAs is pure overhead at small B.
        return _fused_jnp_forward(x.astype(jnp.float32), params).astype(out_dtype)

    p = pack_params(params, compute_dtype)

    TB = _pick_tile(B, block_b)
    B_pad = _round_up(B, TB)

    x = x.astype(compute_dtype)
    if B_pad != B:
        x = jnp.pad(x, ((0, B_pad - B), (0, 0)))

    grid = (B_pad // TB,)

    def resident(shape):
        # Full-array block, constant index_map -> stays in VMEM for the whole grid.
        return pl.BlockSpec(shape, lambda i: (0,) * len(shape))

    out = pl.pallas_call(
        policy_mlp_kernel,
        out_shape=jax.ShapeDtypeStruct((B_pad, OUT_PAD), out_dtype),
        grid=grid,
        in_specs=[
            pl.BlockSpec((TB, IN_DIM), lambda i: (i, 0)),    # x: streamed per tile
            resident((IN_DIM, H1)), resident((1, H1)),       # fc1
            resident((H1, H2)), resident((1, H2)),           # fc2
            resident((H2, OUT_PAD)), resident((1, OUT_PAD)), # fc3 (padded to 8)
        ],
        out_specs=pl.BlockSpec((TB, OUT_PAD), lambda i: (i, 0)),
        compiler_params=pltpu.CompilerParams(
            # Batch axis is embarrassingly parallel -> shards across v7x's 2 TCs;
            # harmless no-op on single-TC v5e/v6e.
            dimension_semantics=("parallel",),
        ),
    )(x, p["w1"], p["b1"], p["w2"], p["b2"], p["w3"], p["b3"])

    return out[:B, :OUT_DIM]


def init_params(key):
    """Deterministic init mimicking nn.Linear's U(-1/sqrt(fan_in), 1/sqrt(fan_in))."""
    def linear(key, fan_in, fan_out):
        kw, kb = jax.random.split(key)
        bound = 1.0 / jnp.sqrt(jnp.float32(fan_in))
        w = jax.random.uniform(kw, (fan_in, fan_out), jnp.float32, -bound, bound)
        b = jax.random.uniform(kb, (1, fan_out), jnp.float32, -bound, bound)
        return w, b

    k1, k2, k3 = jax.random.split(key, 3)
    w1, b1 = linear(k1, IN_DIM, H1)
    w2, b2 = linear(k2, H1, H2)
    w3, b3 = linear(k3, H2, OUT_DIM)
    return {"w1": w1, "b1": b1, "w2": w2, "b2": b2, "w3": w3, "b3": b3}


def _reference_forward(x, p):
    h1 = jnp.maximum(x @ p["w1"] + p["b1"], 0.0)
    h2 = jnp.maximum(h1 @ p["w2"] + p["b2"], 0.0)
    return h2 @ p["w3"] + p["b3"]


# TODO(synk): put_data / train_net (Adam update, Categorical sampling, REINFORCE
# return bookkeeping) are host-side training logic, not part of the forward
# pass; intentionally not ported to Pallas.

if __name__ == "__main__":
    key = jax.random.PRNGKey(0)
    kx, kp = jax.random.split(key)
    params = init_params(kp)

    # --- Small-batch shape from the original module (single 16-dim states). ---
    B_small = 2
    x_small = jax.random.normal(kx, (B_small, IN_DIM), jnp.float32)
    ref_small = _reference_forward(x_small, params)

    # Force the Pallas kernel at the small shape (f32 operands -> exact-ish).
    out_small = jax.block_until_ready(
        policy_forward(x_small, params, use_pallas=True,
                       compute_dtype=jnp.float32))
    assert out_small.shape == (B_small, OUT_DIM)
    assert jnp.allclose(out_small, ref_small, atol=1e-5, rtol=1e-5)

    # Default dispatch at small B takes the fused jnp path (no Pallas overhead).
    out_small_jnp = jax.block_until_ready(policy_forward(x_small, params))
    assert jnp.allclose(out_small_jnp, ref_small, atol=1e-6, rtol=1e-6)

    # --- Batched rollout path: streams 2048-row tiles, VMEM-resident weights,
    # narrow (8-lane) output writeback, bf16 matmul operands by default. ---
    B_big = 4096
    x_big = jax.random.normal(kx, (B_big, IN_DIM), jnp.float32)
    ref_big = _reference_forward(x_big, params)

    out_big_bf16 = jax.block_until_ready(policy_forward(x_big, params))
    assert out_big_bf16.shape == (B_big, OUT_DIM)
    assert jnp.allclose(out_big_bf16, ref_big, atol=5e-2, rtol=5e-2)

    # f32-operand variant for precision-sensitive paths (tight tolerance).
    out_big_f32 = jax.block_until_ready(
        policy_forward(x_big, params, compute_dtype=jnp.float32))
    assert jnp.allclose(out_big_f32, ref_big, atol=1e-5, rtol=1e-5)

    print("KERNEL_OK")
</pallas_src>

<mosaic_0001>
module attributes {stable_mosaic.version = 11 : i64} {
  func.func @policy_mlp_kernel(%arg0: i32, %arg1: memref<8x16xf32, #tpu.memory_space<vmem>>, %arg2: memref<16x64xf32, #tpu.memory_space<vmem>>, %arg3: memref<1x64xf32, #tpu.memory_space<vmem>>, %arg4: memref<64x32xf32, #tpu.memory_space<vmem>>, %arg5: memref<1x32xf32, #tpu.memory_space<vmem>>, %arg6: memref<32x8xf32, #tpu.memory_space<vmem>>, %arg7: memref<1x8xf32, #tpu.memory_space<vmem>>, %arg8: memref<8x8xf32, #tpu.memory_space<vmem>>) attributes {dimension_semantics = [#tpu.dimension_semantics<parallel>], iteration_bounds = array<i64: 1>, scalar_prefetch = 0 : i64, scratch_operands = 0 : i64, tpu.core_type = #tpu.core_type<tc>, window_params = [{transform_indices = @transform_0, window_bounds = array<i64: 8, 16>}, {pipeline_mode = #tpu.pipeline_mode<synchronous>, transform_indices = @transform_1, window_bounds = array<i64: 16, 64>}, {pipeline_mode = #tpu.pipeline_mode<synchronous>, transform_indices = @transform_2, window_bounds = array<i64: 1, 64>}, {pipeline_mode = #tpu.pipeline_mode<synchronous>, transform_indices = @transform_3, window_bounds = array<i64: 64, 32>}, {pipeline_mode = #tpu.pipeline_mode<synchronous>, transform_indices = @transform_4, window_bounds = array<i64: 1, 32>}, {pipeline_mode = #tpu.pipeline_mode<synchronous>, transform_indices = @transform_5, window_bounds = array<i64: 32, 8>}, {pipeline_mode = #tpu.pipeline_mode<synchronous>, transform_indices = @transform_6, window_bounds = array<i64: 1, 8>}, {transform_indices = @transform_7, window_bounds = array<i64: 8, 8>}]} {
    %c0 = arith.constant 0 : index
    %c0_0 = arith.constant 0 : index
    %0 = vector.load %arg1[%c0, %c0_0] : memref<8x16xf32, #tpu.memory_space<vmem>>, vector<8x16xf32>
    %c0_1 = arith.constant 0 : index
    %c0_2 = arith.constant 0 : index
    %1 = vector.load %arg2[%c0_1, %c0_2] : memref<16x64xf32, #tpu.memory_space<vmem>>, vector<16x64xf32>
    %cst = arith.constant dense<0.000000e+00> : vector<8x64xf32>
    %2 = tpu.matmul %0, %1, %cst {dimension_numbers = #tpu.dot_dimension_numbers<[1], [0], [0], [1], [0, 0, 1, 1], [], []>} : vector<8x16xf32>, vector<16x64xf32>, vector<8x64xf32> -> vector<8x64xf32>
    %c0_3 = arith.constant 0 : index
    %c0_4 = arith.constant 0 : index
    %3 = vector.load %arg3[%c0_3, %c0_4] : memref<1x64xf32, #tpu.memory_space<vmem>>, vector<1x64xf32>
    %4 = vector.broadcast %3 : vector<1x64xf32> to vector<8x64xf32>
    %5 = arith.addf %2, %4 : vector<8x64xf32>
    %cst_5 = arith.constant 0.000000e+00 : f32
    %6 = vector.broadcast %cst_5 : f32 to vector<8x64xf32>
    %7 = arith.maximumf %5, %6 : vector<8x64xf32>
    %c0_6 = arith.constant 0 : index
    %c0_7 = arith.constant 0 : index
    %8 = vector.load %arg4[%c0_6, %c0_7] : memref<64x32xf32, #tpu.memory_space<vmem>>, vector<64x32xf32>
    %cst_8 = arith.constant dense<0.000000e+00> : vector<8x32xf32>
    %9 = tpu.matmul %7, %8, %cst_8 {dimension_numbers = #tpu.dot_dimension_numbers<[1], [0], [0], [1], [0, 0, 1, 1], [], []>} : vector<8x64xf32>, vector<64x32xf32>, vector<8x32xf32> -> vector<8x32xf32>
    %c0_9 = arith.constant 0 : index
    %c0_10 = arith.constant 0 : index
    %10 = vector.load %arg5[%c0_9, %c0_10] : memref<1x32xf32, #tpu.memory_space<vmem>>, vector<1x32xf32>
    %11 = vector.broadcast %10 : vector<1x32xf32> to vector<8x32xf32>
    %12 = arith.addf %9, %11 : vector<8x32xf32>
    %cst_11 = arith.constant 0.000000e+00 : f32
    %13 = vector.broadcast %cst_11 : f32 to vector<8x32xf32>
    %14 = arith.maximumf %12, %13 : vector<8x32xf32>
    %c0_12 = arith.constant 0 : index
    %c0_13 = arith.constant 0 : index
    %15 = vector.load %arg6[%c0_12, %c0_13] : memref<32x8xf32, #tpu.memory_space<vmem>>, vector<32x8xf32>
    %cst_14 = arith.constant dense<0.000000e+00> : vector<8x8xf32>
    %16 = tpu.matmul %14, %15, %cst_14 {dimension_numbers = #tpu.dot_dimension_numbers<[1], [0], [0], [1], [0, 0, 1, 1], [], []>} : vector<8x32xf32>, vector<32x8xf32>, vector<8x8xf32> -> vector<8x8xf32>
    %c0_15 = arith.constant 0 : index
    %c0_16 = arith.constant 0 : index
    %17 = vector.load %arg7[%c0_15, %c0_16] : memref<1x8xf32, #tpu.memory_space<vmem>>, vector<1x8xf32>
    %18 = vector.broadcast %17 : vector<1x8xf32> to vector<8x8xf32>
    %19 = arith.addf %16, %18 : vector<8x8xf32>
    %c0_17 = arith.constant 0 : index
    %c0_18 = arith.constant 0 : index
    %20 = vector.load %arg8[%c0_17, %c0_18] : memref<8x8xf32, #tpu.memory_space<vmem>>, vector<8x8xf32>
    tpu.vector_store %arg8[%c0_17, %c0_18], %19 {strides = array<i32>} : memref<8x8xf32, #tpu.memory_space<vmem>>, vector<8x8xf32>,
    return
  }
  func.func @transform_0(%arg0: i32) -> (i32, i32) {
    %c0_i32 = arith.constant 0 : i32
    %c0_i32_0 = arith.constant 0 : i32
    return %arg0, %c0_i32 : i32, i32
  }
  func.func @transform_1(%arg0: i32) -> (i32, i32) {
    %c0_i32 = arith.constant 0 : i32
    %c0_i32_0 = arith.constant 0 : i32
    %c0_i32_1 = arith.constant 0 : i32
    return %c0_i32, %c0_i32_0 : i32, i32
  }
  func.func @transform_2(%arg0: i32) -> (i32, i32) {
    %c0_i32 = arith.constant 0 : i32
    %c0_i32_0 = arith.constant 0 : i32
    %c0_i32_1 = arith.constant 0 : i32
    return %c0_i32, %c0_i32_0 : i32, i32
  }
  func.func @transform_3(%arg0: i32) -> (i32, i32) {
    %c0_i32 = arith.constant 0 : i32
    %c0_i32_0 = arith.constant 0 : i32
    %c0_i32_1 = arith.constant 0 : i32
    return %c0_i32, %c0_i32_0 : i32, i32
  }
  func.func @transform_4(%arg0: i32) -> (i32, i32) {
    %c0_i32 = arith.constant 0 : i32
    %c0_i32_0 = arith.constant 0 : i32
    %c0_i32_1 = arith.constant 0 : i32
    return %c0_i32, %c0_i32_0 : i32, i32
  }
  func.func @transform_5(%arg0: i32) -> (i32, i32) {
    %c0_i32 = arith.constant 0 : i32
    %c0_i32_0 = arith.constant 0 : i32
    %c0_i32_1 = arith.constant 0 : i32
    return %c0_i32, %c0_i32_0 : i32, i32
  }
  func.func @transform_6(%arg0: i32) -> (i32, i32) {
    %c0_i32 = arith.constant 0 : i32
    %c0_i32_0 = arith.constant 0 : i32
    %c0_i32_1 = arith.constant 0 : i32
    return %c0_i32, %c0_i32_0 : i32, i32
  }
  func.func @transform_7(%arg0: i32) -> (i32, i32) {
    %c0_i32 = arith.constant 0 : i32
    %c0_i32_0 = arith.constant 0 : i32
    return %arg0, %c0_i32 : i32, i32
  }
}

</mosaic_0001>

<llo_original>
// kernel: tpu_custom_call.1
$region0: #{tpu_custom_call.1}
  #allocation0 [shape = 'u32[]', space=smem, size = 0x4, offset = 0x4, fixed_abs, tag = 'smem constant byte address 0x4 - core index']
  #allocation1 [shape = 'u32[144,128]{1,0:T(1,128)}', space=vmem, size = 0x12000, scoped, tag = 'internal scratch']
  %s0 = inlined_call_operand.vmem [shape: f32[8,16], index: 0, kind: input, shape index: {}]
  %s1 = inlined_call_operand.vmem [shape: f32[16,64], index: 1, kind: input, shape index: {}]
  %s2 = inlined_call_operand.vmem [shape: f32[1,64], index: 2, kind: input, shape index: {}]
  %s3 = inlined_call_operand.vmem [shape: f32[64,32], index: 3, kind: input, shape index: {}]
  %s4 = inlined_call_operand.vmem [shape: f32[1,32], index: 4, kind: input, shape index: {}]
  %s5 = inlined_call_operand.vmem [shape: f32[32,8], index: 5, kind: input, shape index: {}]
  %s6 = inlined_call_operand.vmem [shape: f32[1,8], index: 6, kind: input, shape index: {}]
  %s7 = inlined_call_operand.hbm [shape: f32[8,8], index: 7, kind: output, shape index: {}]
  %s8 = sld [smem:[#allocation0]]
  $region38: #{tpu_custom_call.1} parent=0
    _
  %s10 = ssub.s32 1, %s8
  %s11 = scalar_select 0, %s10, %s8
  $region1: #{tpu_custom_call.1} parent=0
    #allocation2 [shape = 'u8[4096]{0}', space=vmem, size = 0x1000, scoped, tag = 'output window, operand 0, single buffered']
    #allocation3 [shape = 's32[1]{0}', space=sflag, size = 0x4, scoped, tag = 'scoped memory for tpu_custom_call.1']
    %12 = vsyncpa [#allocation3], 0
    // Predicated region
    $region2: #{tpu_custom_call.1} parent=1 // pred_check
      _
    $region3: #{tpu_custom_call.1} parent=1 // pred_check_branch
      %14 = sbr.rel (0) target = $region5
    $region4: #{tpu_custom_call.1} parent=1 // pred_region
      _
    $region5: #{tpu_custom_call.1} parent=1 // pred_fallthru
      _
    // Predicated region
    $region6: #{tpu_custom_call.1} parent=1 // pred_check
      _
    $region7: #{tpu_custom_call.1} parent=1 // pred_check_branch
      %16 = sbr.rel (0) target = $region9
    $region8: #{tpu_custom_call.1} parent=1 // pred_region
      _
    $region9: #{tpu_custom_call.1} parent=1 // pred_fallthru
      _
    // Predicated region
    $region10: #{tpu_custom_call.1} parent=1 // pred_check
      _
    $region11: #{tpu_custom_call.1} parent=1 // pred_check_branch
      %18 = sbr.rel (0) target = $region13
    $region12: #{tpu_custom_call.1} parent=1 // pred_region
      _
    $region13: #{tpu_custom_call.1} parent=1 // pred_fallthru
      _
    // Predicated region
    $region14: #{tpu_custom_call.1} parent=1 // pred_check
      _
    $region15: #{tpu_custom_call.1} parent=1 // pred_check_branch
      %20 = sbr.rel (0) target = $region17
    $region16: #{tpu_custom_call.1} parent=1 // pred_region
      _
    $region17: #{tpu_custom_call.1} parent=1 // pred_fallthru
      _
    // Predicated region
    $region18: #{tpu_custom_call.1} parent=1 // pred_check
      _
    $region19: #{tpu_custom_call.1} parent=1 // pred_check_branch
      %22 = sbr.rel (0) target = $region21
    $region20: #{tpu_custom_call.1} parent=1 // pred_region
      _
    $region21: #{tpu_custom_call.1} parent=1 // pred_fallthru
      _
    // Predicated region
    $region22: #{tpu_custom_call.1} parent=1 // pred_check
      _
    $region23: #{tpu_custom_call.1} parent=1 // pred_check_branch
      %24 = sbr.rel (0) target = $region25
    $region24: #{tpu_custom_call.1} parent=1 // pred_region
      _
    $region25: #{tpu_custom_call.1} parent=1 // pred_fallthru
      _
    // Predicated region
    $region26: #{tpu_custom_call.1} parent=1 // pred_check
      _
    $region27: #{tpu_custom_call.1} parent=1 // pred_check_branch
      %26 = sbr.rel (0) target = $region29
    $region28: #{tpu_custom_call.1} parent=1 // pred_region
      _
    $region29: #{tpu_custom_call.1} parent=1 // pred_fallthru
      _
    %v27 = vld [vmem:[%s0] sm:$0xff]
    %v28 = vld [vmem:[%s1] sm:$0xff]
    %v29 = vld [vmem:[%s1 + $0x8] sm:$0xff]
    %v30 = vld [vmem:[%s2] sm:$0x1]
    %v32 = vlaneseq
    %v33 = vshrl.u32 %v32, 7
    %v34 = vsub.s32 0, %v33
    %v35 = vrot.slane %v30, %v34
    %vm37 = vcmask 130048
    %v39 = vsel %vm37, %v27, 0
    %41 = vmatprep.subr.mxu0 0.0
    %42 = vmatpush1.msra.mxu0 0.0
    %43 = vmatprep.subr.mxu0 0.0
    %44 = vmatpush1.msra.mxu0 0.0
    %45 = vmatprep.subr.mxu0 0.0
    %46 = vmatpush1.msra.mxu0 0.0
    %47 = vmatprep.subr.mxu0 0.0
    %48 = vmatpush1.msra.mxu0 0.0
    %49 = vmatprep.subr.mxu0 0.0
    %50 = vmatpush1.msra.mxu0 0.0
    %51 = vmatprep.subr.mxu0 0.0
    %52 = vmatpush1.msra.mxu0 0.0
    %53 = vmatprep.subr.mxu0 0.0
    %54 = vmatpush1.msra.mxu0 0.0
    %55 = vmatprep.subr.mxu0 0.0
    %56 = vmatpush1.msra.mxu0 0.0
    %57 = vmatprep.subr.mxu0 0.0
    %58 = vmatpush1.msra.mxu0 0.0
    %59 = vmatprep.subr.mxu0 0.0
    %60 = vmatpush1.msra.mxu0 0.0
    %61 = vmatprep.subr.mxu0 0.0
    %62 = vmatpush1.msra.mxu0 0.0
    %63 = vmatprep.subr.mxu0 0.0
    %64 = vmatpush1.msra.mxu0 0.0
    %65 = vmatprep.subr.mxu0 0.0
    %66 = vmatpush1.msra.mxu0 0.0
    %67 = vmatprep.subr.mxu0 0.0
    %68 = vmatpush1.msra.mxu0 0.0
    %69 = vmatprep.subr.mxu0 0.0
    %70 = vmatpush1.msra.mxu0 %v29
    %71 = vmatprep.subr.mxu0 0.0
    %72 = vmatpush1.msra.mxu0 %v28
    %73 = vmatprep.subr.mxu0 0.0
    %74 = vmatpush2.msra.mxu0 0.0
    %75 = vmatprep.subr.mxu0 0.0
    %76 = vmatpush2.msra.mxu0 0.0
    %77 = vmatprep.subr.mxu0 0.0
    %78 = vmatpush2.msra.mxu0 0.0
    %79 = vmatprep.subr.mxu0 0.0
    %80 = vmatpush2.msra.mxu0 0.0
    %81 = vmatprep.subr.mxu0 0.0
    %82 = vmatpush2.msra.mxu0 0.0
    %83 = vmatprep.subr.mxu0 0.0
    %84 = vmatpush2.msra.mxu0 0.0
    %85 = vmatprep.subr.mxu0 0.0
    %86 = vmatpush2.msra.mxu0 0.0
    %87 = vmatprep.subr.mxu0 0.0
    %88 = vmatpush2.msra.mxu0 0.0
    %89 = vmatprep.subr.mxu0 0.0
    %90 = vmatpush2.msra.mxu0 0.0
    %91 = vmatprep.subr.mxu0 0.0
    %92 = vmatpush2.msra.mxu0 0.0
    %93 = vmatprep.subr.mxu0 0.0
    %94 = vmatpush2.msra.mxu0 0.0
    %95 = vmatprep.subr.mxu0 0.0
    %96 = vmatpush2.msra.mxu0 0.0
    %97 = vmatprep.subr.mxu0 0.0
    %98 = vmatpush2.msra.mxu0 0.0
    %99 = vmatprep.subr.mxu0 0.0
    %100 = vmatpush2.msra.mxu0 0.0
    %101 = vmatprep.subr.mxu0 0.0
    %102 = vmatpush2.msra.mxu0 0.0
    %103 = vmatprep.subr.mxu0 0.0
    %104 = vmatpush2.msra.mxu0 0.0
    %105 = vmatprep.mubr.f32.mxu0 0.0
    %106 = vmatmul.mubr.f32.gmra.mxu0 %v39
    %v107 = vpop.f32.mrf.mxu0
    %v108 = vadd.f32 %v35, %v107
    %v109 = vpop.f32.mrf.mxu0
    %110 = vdwg.mxu0
    %v111 = vmax.f32 %v108, 0.0
    %v112 = vld [vmem:[%s3] sm:$0xff]
    %v113 = vld [vmem:[%s3 + $0x8] sm:$0xff]
    %v114 = vld [vmem:[%s3 + $0x10] sm:$0xff]
    %v115 = vld [vmem:[%s3 + $0x18] sm:$0xff]
    %v116 = vld [vmem:[%s3 + $0x20] sm:$0xff]
    %v117 = vld [vmem:[%s3 + $0x28] sm:$0xff]
    %v118 = vld [vmem:[%s3 + $0x30] sm:$0xff]
    %v119 = vld [vmem:[%s3 + $0x38] sm:$0xff]
    %v120 = vld [vmem:[%s4] sm:$0x1]
    %v122 = vlaneseq
    %v123 = vshrl.u32 %v122, 7
    %v124 = vsub.s32 0, %v123
    %v125 = vrot.slane %v120, %v124
    %vm127 = vcmask 523264
    %v129 = vsel %vm127, %v111, 0
    %131 = vmatprep.subr.mxu0 0.0
    %132 = vmatpush1.msra.mxu0 0.0
    %133 = vmatprep.subr.mxu0 0.0
    %134 = vmatpush1.msra.mxu0 0.0
    %135 = vmatprep.subr.mxu0 0.0
    %136 = vmatpush1.msra.mxu0 0.0
    %137 = vmatprep.subr.mxu0 0.0
    %138 = vmatpush1.msra.mxu0 0.0
    %139 = vmatprep.subr.mxu0 0.0
    %140 = vmatpush1.msra.mxu0 0.0
    %141 = vmatprep.subr.mxu0 0.0
    %142 = vmatpush1.msra.mxu0 0.0
    %143 = vmatprep.subr.mxu0 0.0
    %144 = vmatpush1.msra.mxu0 0.0
    %145 = vmatprep.subr.mxu0 0.0
    %146 = vmatpush1.msra.mxu0 0.0
    %147 = vmatprep.subr.mxu0 0.0
    %148 = vmatpush1.msra.mxu0 %v119
    %149 = vmatprep.subr.mxu0 0.0
    %150 = vmatpush1.msra.mxu0 %v118
    %151 = vmatprep.subr.mxu0 0.0
    %152 = vmatpush1.msra.mxu0 %v117
    %153 = vmatprep.subr.mxu0 0.0
    %154 = vmatpush1.msra.mxu0 %v116
    %155 = vmatprep.subr.mxu0 0.0
    %156 = vmatpush1.msra.mxu0 %v115
    %157 = vmatprep.subr.mxu0 0.0
    %158 = vmatpush1.msra.mxu0 %v114
    %159 = vmatprep.subr.mxu0 0.0
    %160 = vmatpush1.msra.mxu0 %v113
    %161 = vmatprep.subr.mxu0 0.0
    %162 = vmatpush1.msra.mxu0 %v112
    %163 = vmatprep.subr.mxu0 0.0
    %164 = vmatpush2.msra.mxu0 0.0
    %165 = vmatprep.subr.mxu0 0.0
    %166 = vmatpush2.msra.mxu0 0.0
    %167 = vmatprep.subr.mxu0 0.0
    %168 = vmatpush2.msra.mxu0 0.0
    %169 = vmatprep.subr.mxu0 0.0
    %170 = vmatpush2.msra.mxu0 0.0
    %171 = vmatprep.subr.mxu0 0.0
    %172 = vmatpush2.msra.mxu0 0.0
    %173 = vmatprep.subr.mxu0 0.0
    %174 = vmatpush2.msra.mxu0 0.0
    %175 = vmatprep.subr.mxu0 0.0
    %176 = vmatpush2.msra.mxu0 0.0
    %177 = vmatprep.subr.mxu0 0.0
    %178 = vmatpush2.msra.mxu0 0.0
    %179 = vmatprep.subr.mxu0 0.0
    %180 = vmatpush2.msra.mxu0 0.0
    %181 = vmatprep.subr.mxu0 0.0
    %182 = vmatpush2.msra.mxu0 0.0
    %183 = vmatprep.subr.mxu0 0.0
    %184 = vmatpush2.msra.mxu0 0.0
    %185 = vmatprep.subr.mxu0 0.0
    %186 = vmatpush2.msra.mxu0 0.0
    %187 = vmatprep.subr.mxu0 0.0
    %188 = vmatpush2.msra.mxu0 0.0
    %189 = vmatprep.subr.mxu0 0.0
    %190 = vmatpush2.msra.mxu0 0.0
    %191 = vmatprep.subr.mxu0 0.0
    %192 = vmatpush2.msra.mxu0 0.0
    %193 = vmatprep.subr.mxu0 0.0
    %194 = vmatpush2.msra.mxu0 0.0
    %195 = vmatprep.mubr.f32.mxu0 0.0
    %196 = vmatmul.mubr.f32.gmra.mxu0 %v129
    %v197 = vpop.f32.mrf.mxu0
    %v198 = vadd.f32 %v125, %v197
    %v199 = vpop.f32.mrf.mxu0
    %200 = vdwg.mxu0
    %v201 = vmax.f32 %v198, 0.0
    %v202 = vld [vmem:[%s5] sm:$0xff]
    %v203 = vld [vmem:[%s5 + $0x8] sm:$0xff]
    %v204 = vld [vmem:[%s5 + $0x10] sm:$0xff]
    %v205 = vld [vmem:[%s5 + $0x18] sm:$0xff]
    %v206 = vld [vmem:[%s6] sm:$0x1]
    %v208 = vlaneseq
    %v209 = vshrl.u32 %v208, 7
    %v210 = vsub.s32 0, %v209
    %v211 = vrot.slane %v206, %v210
    %vm213 = vcmask 261120
    %v215 = vsel %vm213, %v201, 0
    %217 = vmatprep.subr.mxu0 0.0
    %218 = vmatpush1.msra.mxu0 0.0
    %219 = vmatprep.subr.mxu0 0.0
    %220 = vmatpush1.msra.mxu0 0.0
    %221 = vmatprep.subr.mxu0 0.0
    %222 = vmatpush1.msra.mxu0 0.0
    %223 = vmatprep.subr.mxu0 0.0
    %224 = vmatpush1.msra.mxu0 0.0
    %225 = vmatprep.subr.mxu0 0.0
    %226 = vmatpush1.msra.mxu0 0.0
    %227 = vmatprep.subr.mxu0 0.0
    %228 = vmatpush1.msra.mxu0 0.0
    %229 = vmatprep.subr.mxu0 0.0
    %230 = vmatpush1.msra.mxu0 0.0
    %231 = vmatprep.subr.mxu0 0.0
    %232 = vmatpush1.msra.mxu0 0.0
    %233 = vmatprep.subr.mxu0 0.0
    %234 = vmatpush1.msra.mxu0 0.0
    %235 = vmatprep.subr.mxu0 0.0
    %236 = vmatpush1.msra.mxu0 0.0
    %237 = vmatprep.subr.mxu0 0.0
    %238 = vmatpush1.msra.mxu0 0.0
    %239 = vmatprep.subr.mxu0 0.0
    %240 = vmatpush1.msra.mxu0 0.0
    %241 = vmatprep.subr.mxu0 0.0
    %242 = vmatpush1.msra.mxu0 %v205
    %243 = vmatprep.subr.mxu0 0.0
    %244 = vmatpush1.msra.mxu0 %v204
    %245 = vmatprep.subr.mxu0 0.0
    %246 = vmatpush1.msra.mxu0 %v203
    %247 = vmatprep.subr.mxu0 0.0
    %248 = vmatpush1.msra.mxu0 %v202
    %249 = vmatprep.subr.mxu0 0.0
    %250 = vmatpush2.msra.mxu0 0.0
    %251 = vmatprep.subr.mxu0 0.0
    %252 = vmatpush2.msra.mxu0 0.0
    %253 = vmatprep.subr.mxu0 0.0
    %254 = vmatpush2.msra.mxu0 0.0
    %255 = vmatprep.subr.mxu0 0.0
    %256 = vmatpush2.msra.mxu0 0.0
    %257 = vmatprep.subr.mxu0 0.0
    %258 = vmatpush2.msra.mxu0 0.0
    %259 = vmatprep.subr.mxu0 0.0
    %260 = vmatpush2.msra.mxu0 0.0
    %261 = vmatprep.subr.mxu0 0.0
    %262 = vmatpush2.msra.mxu0 0.0
    %263 = vmatprep.subr.mxu0 0.0
    %264 = vmatpush2.msra.mxu0 0.0
    %265 = vmatprep.subr.mxu0 0.0
    %266 = vmatpush2.msra.mxu0 0.0
    %267 = vmatprep.subr.mxu0 0.0
    %268 = vmatpush2.msra.mxu0 0.0
    %269 = vmatprep.subr.mxu0 0.0
    %270 = vmatpush2.msra.mxu0 0.0
    %271 = vmatprep.subr.mxu0 0.0
    %272 = vmatpush2.msra.mxu0 0.0
    %273 = vmatprep.subr.mxu0 0.0
    %274 = vmatpush2.msra.mxu0 0.0
    %275 = vmatprep.subr.mxu0 0.0
    %276 = vmatpush2.msra.mxu0 0.0
    %277 = vmatprep.subr.mxu0 0.0
    %278 = vmatpush2.msra.mxu0 0.0
    %279 = vmatprep.subr.mxu0 0.0
    %280 = vmatpush2.msra.mxu0 0.0
    %281 = vmatprep.mubr.f32.mxu0 0.0
    %282 = vmatmul.mubr.f32.gmra.mxu0 %v215
    %v283 = vpop.f32.mrf.mxu0
    %v284 = vadd.f32 %v211, %v283
    %v285 = vpop.f32.mrf.mxu0
    %286 = vdwg.mxu0
    %vm287 = vcmask 64512
    %288 = vst.msk [vmem:[#allocation2] sm:$0xff] %vm287, %v284
    // Predicated region
    $region30: #{tpu_custom_call.1} parent=1 // pred_check
      _
    $region31: #{tpu_custom_call.1} parent=1 // pred_check_branch
      %290 = sbr.rel (0) target = $region33
    $region32: #{tpu_custom_call.1} parent=1 // pred_region
      %s292 = ssub.s32 128, 128
      %293 = vsyncadd [#allocation3], %s292
      %s295 = sshll.u32 [#allocation2], 4
      %s296 = int_to_ptr.vmem [resolvable:$true] %s295
      %298 = dma.vmem_to_hbm [thread:$0]  %s296, 128, %s7, [#allocation3]
    $region33: #{tpu_custom_call.1} parent=1 // pred_fallthru
      _
    // Predicated region
    $region34: #{tpu_custom_call.1} parent=1 // pred_check
      _
    $region35: #{tpu_custom_call.1} parent=1 // pred_check_branch
      %300 = sbr.rel (0) target = $region37
    $region36: #{tpu_custom_call.1} parent=1 // pred_region
      %301 = dma.done [#allocation3], 128
    $region37: #{tpu_custom_call.1} parent=1 // pred_fallthru
      _
    %302 = vsyncpa [#allocation3], 1

</llo_original>
